<compile_context>
chip_gen: v6e
topology: v6e:2x2x1
jax: 0.10.0
libtpu: 0.0.40
codegen_flags: <defaults>
</compile_context>

<pallas_src>
import math

import jax
import jax.numpy as jnp
from jax import lax
from jax.experimental import pallas as pl
from jax.experimental.pallas import tpu as pltpu

HIDDEN = 32      # nn.Linear(flat_in, 32)
P_PAD = 128      # pooled spatial positions padded to one full lane tile
CKK_PAD = 32     # 3*k*k padded to an f32 sublane multiple
OUT_PAD = 128    # lane-dense output width
C_IN = 3         # nn.Conv2d(3, num_filters, kernel_size)


def _round_up(x, m):
    return ((x + m - 1) // m) * m


# ----------------------------- parameter setup ----------------------------- #

def scale_noise(key, size):
    x = jax.random.normal(key, (size,), dtype=jnp.float32)
    return jnp.sign(x) * jnp.sqrt(jnp.abs(x))


def init_params(key, input_size, kernel_size, num_filters, out_features):
    H, W = input_size
    k = kernel_size
    F_ = num_filters
    Hc, Wc = H - k + 1, W - k + 1
    Hp, Wp = Hc // 2, Wc // 2
    flat_in = F_ * Hp * Wp  # == int(num_filters * (H-k+1) * (W-k+1) / 4)

    keys = jax.random.split(key, 8)
    conv_w = jax.random.uniform(keys[0], (F_, C_IN, k, k), jnp.float32, -0.2, 0.2)
    conv_b = jax.random.uniform(keys[1], (F_,), jnp.float32, -0.2, 0.2)

    lim1 = 1.0 / math.sqrt(flat_in)
    w1 = jax.random.uniform(keys[2], (HIDDEN, flat_in), jnp.float32, -lim1, lim1)
    b1 = jax.random.uniform(keys[3], (HIDDEN,), jnp.float32, -lim1, lim1)
    alpha = jnp.float32(0.25)  # nn.PReLU() default init

    # NoisyLinear(32, out_features): factorized Gaussian noise
    mu_range = 1.0 / math.sqrt(HIDDEN)
    w_mu = jax.random.uniform(keys[4], (out_features, HIDDEN), jnp.float32, -mu_range, mu_range)
    w_sigma = jnp.full((out_features, HIDDEN), 0.5 / math.sqrt(HIDDEN), jnp.float32)
    b_mu = jax.random.uniform(keys[5], (out_features,), jnp.float32, -mu_range, mu_range)
    b_sigma = jnp.full((out_features,), 0.5 / math.sqrt(out_features), jnp.float32)
    eps_in = scale_noise(keys[6], HIDDEN)
    eps_out = scale_noise(keys[7], out_features)
    w_eps = jnp.outer(eps_out, eps_in)
    b_eps = eps_out

    return dict(conv_w=conv_w, conv_b=conv_b, w1=w1, b1=b1, alpha=alpha,
                w_mu=w_mu, w_sigma=w_sigma, w_eps=w_eps,
                b_mu=b_mu, b_sigma=b_sigma, b_eps=b_eps,
                dims=(H, W, k, F_, Hc, Wc, Hp, Wp, flat_in, out_features))


def pack_params(p, batch):
    """One-time repack of PyTorch-layout params into kernel-ready layouts.

    Re-run when NoisyLinear noise is reset, or if the batch size changes.
    """
    H, W, k, F_, Hc, Wc, Hp, Wp, flat_in, out_features = p["dims"]
    P = Hp * Wp
    CKK = C_IN * k * k
    N = batch
    NF = N * F_
    NF_pad = _round_up(NF, 8)
    N_pad = _round_up(N, 8)

    assert P <= P_PAD, f"Hp*Wp={P} exceeds P_PAD={P_PAD}"
    assert CKK <= CKK_PAD
    assert out_features <= OUT_PAD
    assert Hc % 2 == 0 and Wc % 2 == 0, "MaxPool2d(2,2) path requires even conv output dims"

    # Conv weight as a batch-block-diagonal GEMM matrix: rows (n, f), cols (n, ckk).
    wc = jnp.zeros((F_, CKK_PAD), jnp.float32).at[:, :CKK].set(p["conv_w"].reshape(F_, CKK))
    wcbig = jnp.kron(jnp.eye(N, dtype=jnp.float32), wc)                    # (N*F, N*CKK_PAD)
    wcbig = jnp.zeros((NF_pad, N * CKK_PAD), jnp.float32).at[:NF].set(wcbig)

    # First linear rearranged for the block-diagonal trick:
    #   w1big[p, f*32 + o] = w1[o, f*P + p].  Rows p >= P are EXACTLY ZERO, so the
    #   padded pooled lanes (p >= P) never contribute — do not change this padding.
    w1r = p["w1"].reshape(HIDDEN, F_, P)
    w1perm = jnp.transpose(w1r, (2, 1, 0)).reshape(P, F_ * HIDDEN)
    w1big = jnp.zeros((P_PAD, F_ * HIDDEN), jnp.float32).at[:P].set(w1perm)

    q = jnp.arange(F_ * HIDDEN)
    dmask = (q[None, :] // HIDDEN == jnp.arange(F_)[:, None]).astype(jnp.float32)  # (F, F*32)
    dmask_big = jnp.zeros((NF_pad, F_ * HIDDEN), jnp.float32).at[:NF].set(jnp.tile(dmask, (N, 1)))
    cmat = jnp.tile(jnp.eye(HIDDEN, dtype=jnp.float32), (F_, 1))                    # (F*32, 32)

    # redmat[n, n*F + f] = 1 : sums the per-filter rows of each sample (GEMM reduce,
    # no cross-sublane segmented reduction needed).
    r = jnp.arange(NF_pad)
    n_idx = jnp.arange(N_pad)
    redmat = ((n_idx[:, None] == (r[None, :] // F_))
              & (r[None, :] < NF) & (n_idx[:, None] < N)).astype(jnp.float32)       # (N_pad, NF_pad)

    # Conv bias folded through maxpool (max(x+b)=max(x)+b) and the affine Linear:
    #   b1_eff[o] = b1[o] + sum_f conv_b[f] * sum_{p<P} w1[o, f*P + p]
    w1_sum_p = p["w1"].reshape(HIDDEN, F_, P).sum(axis=2)                            # (32, F)
    b1_eff = p["b1"] + (w1_sum_p * p["conv_b"][None, :]).sum(axis=1)                 # (32,)

    # NoisyLinear effective weight/bias precombined (matches forward semantics:
    # noise always applied, as in the PyTorch module's forward()).
    w_eff = p["w_mu"] + p["w_sigma"] * p["w_eps"]                                    # (out, 32)
    b_eff = p["b_mu"] + p["b_sigma"] * p["b_eps"]                                    # (out,)
    weff = jnp.zeros((HIDDEN, OUT_PAD), jnp.float32).at[:, :out_features].set(w_eff.T)

    bias2 = jnp.zeros((2, OUT_PAD), jnp.float32)
    bias2 = bias2.at[0, :HIDDEN].set(b1_eff).at[1, :out_features].set(b_eff)

    return dict(
        alpha=jnp.reshape(p["alpha"], (1, 1)).astype(jnp.float32),
        wcbig=wcbig, w1big=w1big, dmask=dmask_big, redmat=redmat, cmat=cmat,
        bias2=bias2, weff=weff,
    )


# ------------------------------- fused kernel ------------------------------ #

def make_forward(dims, batch):
    H, W, k, F_, Hc, Wc, Hp, Wp, flat_in, out_features = dims
    P = Hp * Wp
    CKK = C_IN * k * k
    N = batch
    NF_pad = _round_up(N * F_, 8)
    N_pad = _round_up(N, 8)
    assert P <= P_PAD and Hc % 2 == 0 and Wc % 2 == 0

    # Whole working set is VMEM-resident (gridless call).  Guard against batch growth:
    # on v5e the default scoped VMEM limit is ~16 MiB, on v7x physical VMEM is 64 MiB.
    # For large N, tile the batch with a grid + dimension_semantics=("parallel",).
    resident_bytes = 4 * (N * CKK_PAD * 4 * P_PAD            # patches
                          + NF_pad * N * CKK_PAD             # wcbig
                          + P_PAD * F_ * HIDDEN              # w1big
                          + NF_pad * F_ * HIDDEN             # dmask
                          + N_pad * NF_pad                   # redmat
                          + F_ * HIDDEN * HIDDEN             # cmat
                          + 2 * OUT_PAD + HIDDEN * OUT_PAD   # bias2 + weff
                          + N_pad * OUT_PAD)                 # output
    assert resident_bytes < 12 * 2**20, (
        f"resident VMEM {resident_bytes} B too large for the gridless design; "
        "tile the batch with a grid")

    def fused_kernel(alpha_ref, patches_ref, wcbig_ref, w1big_ref, dmask_ref,
                     redmat_ref, cmat_ref, bias2_ref, weff_ref, out_ref):
        # (1) Conv for the WHOLE batch & all 4 pooling phases in ONE GEMM.
        #     Rows = (n, f) via the batch-block-diagonal conv weight; lanes = (phase, p).
        conv_all = jnp.dot(wcbig_ref[...], patches_ref[...],
                           preferred_element_type=jnp.float32)          # (NF_pad, 4*P_PAD)

        # (2) MaxPool2d(2,2): 3 whole-array maxes over 128-lane-aligned phase slabs.
        #     (conv bias is folded into bias2[0] in pack_params.)
        pooled = jnp.maximum(
            jnp.maximum(conv_all[:, 0:P_PAD], conv_all[:, P_PAD:2 * P_PAD]),
            jnp.maximum(conv_all[:, 2 * P_PAD:3 * P_PAD], conv_all[:, 3 * P_PAD:4 * P_PAD]))

        # (3) Flatten + Linear(flat_in -> 32), batched over N, no reshapes:
        #     block-diagonal trick + masked row-reduce done as a tiny GEMM.
        tmp = jnp.dot(pooled, w1big_ref[...], preferred_element_type=jnp.float32)   # (NF_pad, F*32)
        hc = jnp.dot(tmp * dmask_ref[...], cmat_ref[...],
                     preferred_element_type=jnp.float32)                            # (NF_pad, 32)
        bias2 = bias2_ref[...]
        h = jnp.dot(redmat_ref[...], hc,
                    preferred_element_type=jnp.float32) + bias2[0:1, :HIDDEN]       # (N_pad, 32)

        # (4) PReLU (alpha from SMEM scalar path).
        alpha = alpha_ref[0, 0]
        h = jnp.where(h >= 0.0, h, alpha * h)

        # (5) NoisyLinear with precombined w_eff/b_eff; ONE lane-dense store.
        out = jnp.dot(h, weff_ref[...], preferred_element_type=jnp.float32) + bias2[1:2, :]
        out_ref[...] = out.astype(out_ref.dtype)                                     # (N_pad, 128)

    @jax.jit
    def forward(x, packed):
        assert x.shape[0] == N, f"packed params were built for batch={N}"
        # ---- im2col + pooling-phase split + padding (fused XLA glue) ----
        cols = []
        for di in range(k):
            for dj in range(k):
                cols.append(x[:, :, di:di + Hc, dj:dj + Wc])            # (N, C, Hc, Wc)
        pat = jnp.stack(cols, axis=2).reshape(N, CKK, Hc, Wc)           # (c, di, dj) order
        phases = [pat[:, :, pi::2, pj::2].reshape(N, CKK, P)
                  for pi in range(2) for pj in range(2)]
        pat4 = jnp.stack(phases, axis=1)                                # (N, 4, CKK, P)
        pat4 = jnp.pad(pat4, ((0, 0), (0, 0), (0, CKK_PAD - CKK), (0, P_PAD - P)))
        # rows = (n, ckk), lanes = (phase, p): each phase is a contiguous 128-lane slab
        patches = jnp.transpose(pat4, (0, 2, 1, 3)).reshape(N * CKK_PAD, 4 * P_PAD)

        out = pl.pallas_call(
            fused_kernel,
            out_shape=jax.ShapeDtypeStruct((N_pad, OUT_PAD), jnp.float32),
            in_specs=[pl.BlockSpec(memory_space=pltpu.MemorySpace.SMEM)]
                     + [pl.BlockSpec(memory_space=pltpu.MemorySpace.VMEM)] * 8,
            out_specs=pl.BlockSpec(memory_space=pltpu.MemorySpace.VMEM),
        )(packed["alpha"], patches, packed["wcbig"], packed["w1big"],
          packed["dmask"], packed["redmat"], packed["cmat"],
          packed["bias2"], packed["weff"])
        return out[:N, :out_features]

    return forward


# ------------------------------ pure-JAX reference -------------------------- #

def reference_forward(x, p):
    H, W, k, F_, Hc, Wc, Hp, Wp, flat_in, out_features = p["dims"]
    conv = lax.conv_general_dilated(
        x, p["conv_w"], window_strides=(1, 1), padding="VALID",
        dimension_numbers=("NCHW", "OIHW", "NCHW")) + p["conv_b"][None, :, None, None]
    pooled = lax.reduce_window(conv, -jnp.inf, lax.max,
                               window_dimensions=(1, 1, 2, 2),
                               window_strides=(1, 1, 2, 2), padding="VALID")
    flat = pooled.reshape(x.shape[0], -1)
    h = flat @ p["w1"].T + p["b1"]
    h = jnp.where(h >= 0.0, h, p["alpha"] * h)
    w_eff = p["w_mu"] + p["w_sigma"] * p["w_eps"]
    b_eff = p["b_mu"] + p["b_sigma"] * p["b_eps"]
    return h @ w_eff.T + b_eff


# TODO(synk): NoisyNetwork.act() (argmax + .item() host readback) is host-side glue
# and is intentionally not implemented as a kernel.

if __name__ == "__main__":
    key = jax.random.PRNGKey(0)
    k_param, k_x = jax.random.split(key)

    input_size = (16, 16)
    kernel_size = 3
    num_filters = 4
    out_features = 5
    batch = 2

    params = init_params(k_param, input_size, kernel_size, num_filters, out_features)
    packed = pack_params(params, batch)
    forward = make_forward(params["dims"], batch)

    x = jax.random.normal(k_x, (batch, C_IN, input_size[0], input_size[1]), jnp.float32)

    out = forward(x, packed)
    out = jax.block_until_ready(out)

    ref = reference_forward(x, params)
    assert out.shape == (batch, out_features), out.shape
    assert jnp.allclose(out, ref, atol=1e-4, rtol=1e-4), (out, ref)

    print("KERNEL_OK")
</pallas_src>

<mosaic_0001>
module attributes {stable_mosaic.version = 11 : i64} {
  func.func @fused_kernel(%arg0: memref<1x1xf32, #tpu.memory_space<smem>>, %arg1: memref<64x512xf32, #tpu.memory_space<vmem>>, %arg2: memref<8x64xf32, #tpu.memory_space<vmem>>, %arg3: memref<128x128xf32, #tpu.memory_space<vmem>>, %arg4: memref<8x128xf32, #tpu.memory_space<vmem>>, %arg5: memref<8x8xf32, #tpu.memory_space<vmem>>, %arg6: memref<128x32xf32, #tpu.memory_space<vmem>>, %arg7: memref<2x128xf32, #tpu.memory_space<vmem>>, %arg8: memref<32x128xf32, #tpu.memory_space<vmem>>, %arg9: memref<8x128xf32, #tpu.memory_space<vmem>>) attributes {dimension_semantics = [], scalar_prefetch = 0 : i64, scratch_operands = 0 : i64, tpu.core_type = #tpu.core_type<tc>} {
    %c0 = arith.constant 0 : index
    %c0_0 = arith.constant 0 : index
    %0 = vector.load %arg2[%c0, %c0_0] : memref<8x64xf32, #tpu.memory_space<vmem>>, vector<8x64xf32>
    %c0_1 = arith.constant 0 : index
    %c0_2 = arith.constant 0 : index
    %1 = vector.load %arg1[%c0_1, %c0_2] : memref<64x512xf32, #tpu.memory_space<vmem>>, vector<64x512xf32>
    %cst = arith.constant dense<0.000000e+00> : vector<8x512xf32>
    %2 = tpu.matmul %0, %1, %cst {dimension_numbers = #tpu.dot_dimension_numbers<[1], [0], [0], [1], [0, 0, 1, 1], [], []>} : vector<8x64xf32>, vector<64x512xf32>, vector<8x512xf32> -> vector<8x512xf32>
    %3 = vector.extract_strided_slice %2 {offsets = [0, 0], sizes = [8, 128], strides = [1, 1]} : vector<8x512xf32> to vector<8x128xf32>
    %4 = vector.extract_strided_slice %2 {offsets = [0, 128], sizes = [8, 128], strides = [1, 1]} : vector<8x512xf32> to vector<8x128xf32>
    %5 = arith.maximumf %3, %4 : vector<8x128xf32>
    %6 = vector.extract_strided_slice %2 {offsets = [0, 256], sizes = [8, 128], strides = [1, 1]} : vector<8x512xf32> to vector<8x128xf32>
    %7 = vector.extract_strided_slice %2 {offsets = [0, 384], sizes = [8, 128], strides = [1, 1]} : vector<8x512xf32> to vector<8x128xf32>
    %8 = arith.maximumf %6, %7 : vector<8x128xf32>
    %9 = arith.maximumf %5, %8 : vector<8x128xf32>
    %c0_3 = arith.constant 0 : index
    %c0_4 = arith.constant 0 : index
    %10 = vector.load %arg3[%c0_3, %c0_4] : memref<128x128xf32, #tpu.memory_space<vmem>>, vector<128x128xf32>
    %cst_5 = arith.constant dense<0.000000e+00> : vector<8x128xf32>
    %11 = tpu.matmul %9, %10, %cst_5 {dimension_numbers = #tpu.dot_dimension_numbers<[1], [0], [0], [1], [0, 0, 1, 1], [], []>} : vector<8x128xf32>, vector<128x128xf32>, vector<8x128xf32> -> vector<8x128xf32>
    %c0_6 = arith.constant 0 : index
    %c0_7 = arith.constant 0 : index
    %12 = vector.load %arg4[%c0_6, %c0_7] : memref<8x128xf32, #tpu.memory_space<vmem>>, vector<8x128xf32>
    %13 = arith.mulf %11, %12 : vector<8x128xf32>
    %c0_8 = arith.constant 0 : index
    %c0_9 = arith.constant 0 : index
    %14 = vector.load %arg6[%c0_8, %c0_9] : memref<128x32xf32, #tpu.memory_space<vmem>>, vector<128x32xf32>
    %cst_10 = arith.constant dense<0.000000e+00> : vector<8x32xf32>
    %15 = tpu.matmul %13, %14, %cst_10 {dimension_numbers = #tpu.dot_dimension_numbers<[1], [0], [0], [1], [0, 0, 1, 1], [], []>} : vector<8x128xf32>, vector<128x32xf32>, vector<8x32xf32> -> vector<8x32xf32>
    %c0_11 = arith.constant 0 : index
    %c0_12 = arith.constant 0 : index
    %16 = vector.load %arg7[%c0_11, %c0_12] : memref<2x128xf32, #tpu.memory_space<vmem>>, vector<2x128xf32>
    %c0_13 = arith.constant 0 : index
    %c0_14 = arith.constant 0 : index
    %17 = vector.load %arg5[%c0_13, %c0_14] : memref<8x8xf32, #tpu.memory_space<vmem>>, vector<8x8xf32>
    %cst_15 = arith.constant dense<0.000000e+00> : vector<8x32xf32>
    %18 = tpu.matmul %17, %15, %cst_15 {dimension_numbers = #tpu.dot_dimension_numbers<[1], [0], [0], [1], [0, 0, 1, 1], [], []>} : vector<8x8xf32>, vector<8x32xf32>, vector<8x32xf32> -> vector<8x32xf32>
    %19 = vector.extract_strided_slice %16 {offsets = [0, 0], sizes = [1, 32], strides = [1, 1]} : vector<2x128xf32> to vector<1x32xf32>
    %20 = vector.broadcast %19 : vector<1x32xf32> to vector<8x32xf32>
    %21 = arith.addf %18, %20 : vector<8x32xf32>
    %c0_16 = arith.constant 0 : index
    %c0_17 = arith.constant 0 : index
    %22 = memref.load %arg0[%c0_16, %c0_17] : memref<1x1xf32, #tpu.memory_space<smem>>
    %cst_18 = arith.constant 0.000000e+00 : f32
    %23 = vector.broadcast %cst_18 : f32 to vector<8x32xf32>
    %24 = arith.cmpf oge, %21, %23 : vector<8x32xf32>
    %25 = vector.broadcast %22 : f32 to vector<8x32xf32>
    %26 = arith.mulf %25, %21 : vector<8x32xf32>
    %27 = arith.select %24, %21, %26 : vector<8x32xi1>, vector<8x32xf32>
    %c0_19 = arith.constant 0 : index
    %c0_20 = arith.constant 0 : index
    %28 = vector.load %arg8[%c0_19, %c0_20] : memref<32x128xf32, #tpu.memory_space<vmem>>, vector<32x128xf32>
    %cst_21 = arith.constant dense<0.000000e+00> : vector<8x128xf32>
    %29 = tpu.matmul %27, %28, %cst_21 {dimension_numbers = #tpu.dot_dimension_numbers<[1], [0], [0], [1], [0, 0, 1, 1], [], []>} : vector<8x32xf32>, vector<32x128xf32>, vector<8x128xf32> -> vector<8x128xf32>
    %30 = vector.extract_strided_slice %16 {offsets = [1, 0], sizes = [1, 128], strides = [1, 1]} : vector<2x128xf32> to vector<1x128xf32>
    %31 = vector.broadcast %30 : vector<1x128xf32> to vector<8x128xf32>
    %32 = arith.addf %29, %31 : vector<8x128xf32>
    %c0_22 = arith.constant 0 : index
    %c0_23 = arith.constant 0 : index
    %33 = vector.load %arg9[%c0_22, %c0_23] : memref<8x128xf32, #tpu.memory_space<vmem>>, vector<8x128xf32>
    tpu.vector_store %arg9[%c0_22, %c0_23], %32 {strides = array<i32>} : memref<8x128xf32, #tpu.memory_space<vmem>>, vector<8x128xf32>,
    return
  }
}

</mosaic_0001>

<llo_original>
// kernel: forward.1
$region0: #{forward.1}
  #allocation0 [shape = 'u32[]', space=smem, size = 0x4, offset = 0x4, fixed_abs, tag = 'smem constant byte address 0x4 - core index']
  #allocation1 [shape = 'u32[144,128]{1,0:T(1,128)}', space=vmem, size = 0x12000, scoped, tag = 'internal scratch']
  #allocation2 [shape = 'f32[1,1]{1,0:T(1,128)S(6)}', space=smem, size = 0x200, scoped, tag = 'scoped memory for forward.1']
  %s0 = inlined_call_operand.<no memory space> [shape: f32[1,1], index: 0, kind: input, shape index: {}]
  %s1 = inlined_call_operand.vmem [shape: f32[64,512], index: 1, kind: input, shape index: {}]
  %s2 = inlined_call_operand.vmem [shape: f32[8,64], index: 2, kind: input, shape index: {}]
  %s3 = inlined_call_operand.vmem [shape: f32[128,128], index: 3, kind: input, shape index: {}]
  %s4 = inlined_call_operand.vmem [shape: f32[8,128], index: 4, kind: input, shape index: {}]
  %s5 = inlined_call_operand.vmem [shape: f32[8,8], index: 5, kind: input, shape index: {}]
  %s6 = inlined_call_operand.vmem [shape: f32[128,32], index: 6, kind: input, shape index: {}]
  %s7 = inlined_call_operand.vmem [shape: f32[2,128], index: 7, kind: input, shape index: {}]
  %s8 = inlined_call_operand.vmem [shape: f32[32,128], index: 8, kind: input, shape index: {}]
  %s9 = inlined_call_operand.vmem [shape: f32[8,128], index: 9, kind: output, shape index: {}]
  %s10 = sld [smem:[#allocation0]]
  $region46: #{forward.1} parent=0
    _
  %s12 = ssub.s32 1, %s10
  %s13 = scalar_select 0, %s12, %s10
  %14 = sst [smem:[#allocation2]] %s0
  // Predicated region
  $region2: #{forward.1} parent=0 // pred_check
    _
  $region3: #{forward.1} parent=0 // pred_check_branch
    %16 = sbr.rel (0) target = $region5
  $region4: #{forward.1} parent=0 // pred_region
    _
  $region5: #{forward.1} parent=0 // pred_fallthru
    _
  // Predicated region
  $region6: #{forward.1} parent=0 // pred_check
    _
  $region7: #{forward.1} parent=0 // pred_check_branch
    %18 = sbr.rel (0) target = $region9
  $region8: #{forward.1} parent=0 // pred_region
    _
  $region9: #{forward.1} parent=0 // pred_fallthru
    _
  // Predicated region
  $region10: #{forward.1} parent=0 // pred_check
    _
  $region11: #{forward.1} parent=0 // pred_check_branch
    %20 = sbr.rel (0) target = $region13
  $region12: #{forward.1} parent=0 // pred_region
    _
  $region13: #{forward.1} parent=0 // pred_fallthru
    _
  // Predicated region
  $region14: #{forward.1} parent=0 // pred_check
    _
  $region15: #{forward.1} parent=0 // pred_check_branch
    %22 = sbr.rel (0) target = $region17
  $region16: #{forward.1} parent=0 // pred_region
    _
  $region17: #{forward.1} parent=0 // pred_fallthru
    _
  // Predicated region
  $region18: #{forward.1} parent=0 // pred_check
    _
  $region19: #{forward.1} parent=0 // pred_check_branch
    %24 = sbr.rel (0) target = $region21
  $region20: #{forward.1} parent=0 // pred_region
    _
  $region21: #{forward.1} parent=0 // pred_fallthru
    _
  // Predicated region
  $region22: #{forward.1} parent=0 // pred_check
    _
  $region23: #{forward.1} parent=0 // pred_check_branch
    %26 = sbr.rel (0) target = $region25
  $region24: #{forward.1} parent=0 // pred_region
    _
  $region25: #{forward.1} parent=0 // pred_fallthru
    _
  // Predicated region
  $region26: #{forward.1} parent=0 // pred_check
    _
  $region27: #{forward.1} parent=0 // pred_check_branch
    %28 = sbr.rel (0) target = $region29
  $region28: #{forward.1} parent=0 // pred_region
    _
  $region29: #{forward.1} parent=0 // pred_fallthru
    _
  // Predicated region
  $region30: #{forward.1} parent=0 // pred_check
    _
  $region31: #{forward.1} parent=0 // pred_check_branch
    %30 = sbr.rel (0) target = $region33
  $region32: #{forward.1} parent=0 // pred_region
    _
  $region33: #{forward.1} parent=0 // pred_fallthru
    _
  // Predicated region
  $region34: #{forward.1} parent=0 // pred_check
    _
  $region35: #{forward.1} parent=0 // pred_check_branch
    %32 = sbr.rel (0) target = $region37
  $region36: #{forward.1} parent=0 // pred_region
    _
  $region37: #{forward.1} parent=0 // pred_fallthru
    _
  %v33 = vld [vmem:[%s2] sm:$0xff]
  %v34 = vld [vmem:[%s1] sm:$0xff]
  %v35 = vld [vmem:[%s1 + $0x8] sm:$0xff]
  %v36 = vld [vmem:[%s1 + $0x10] sm:$0xff]
  %v37 = vld [vmem:[%s1 + $0x18] sm:$0xff]
  %v38 = vld [vmem:[%s1 + $0x20] sm:$0xff]
  %v39 = vld [vmem:[%s1 + $0x28] sm:$0xff]
  %v40 = vld [vmem:[%s1 + $0x30] sm:$0xff]
  %v41 = vld [vmem:[%s1 + $0x38] sm:$0xff]
  %v42 = vld [vmem:[%s1 + $0x40] sm:$0xff]
  %v43 = vld [vmem:[%s1 + $0x48] sm:$0xff]
  %v44 = vld [vmem:[%s1 + $0x50] sm:$0xff]
  %v45 = vld [vmem:[%s1 + $0x58] sm:$0xff]
  %v46 = vld [vmem:[%s1 + $0x60] sm:$0xff]
  %v47 = vld [vmem:[%s1 + $0x68] sm:$0xff]
  %v48 = vld [vmem:[%s1 + $0x70] sm:$0xff]
  %v49 = vld [vmem:[%s1 + $0x78] sm:$0xff]
  %v50 = vld [vmem:[%s1 + $0x80] sm:$0xff]
  %v51 = vld [vmem:[%s1 + $0x88] sm:$0xff]
  %v52 = vld [vmem:[%s1 + $0x90] sm:$0xff]
  %v53 = vld [vmem:[%s1 + $0x98] sm:$0xff]
  %v54 = vld [vmem:[%s1 + $0xa0] sm:$0xff]
  %v55 = vld [vmem:[%s1 + $0xa8] sm:$0xff]
  %v56 = vld [vmem:[%s1 + $0xb0] sm:$0xff]
  %v57 = vld [vmem:[%s1 + $0xb8] sm:$0xff]
  %v58 = vld [vmem:[%s1 + $0xc0] sm:$0xff]
  %v59 = vld [vmem:[%s1 + $0xc8] sm:$0xff]
  %v60 = vld [vmem:[%s1 + $0xd0] sm:$0xff]
  %v61 = vld [vmem:[%s1 + $0xd8] sm:$0xff]
  %v62 = vld [vmem:[%s1 + $0xe0] sm:$0xff]
  %v63 = vld [vmem:[%s1 + $0xe8] sm:$0xff]
  %v64 = vld [vmem:[%s1 + $0xf0] sm:$0xff]
  %v65 = vld [vmem:[%s1 + $0xf8] sm:$0xff]
  %vm66 = vcmask 523264
  %v68 = vsel %vm66, %v33, 0
  %70 = vmatprep.subr.mxu0 0.0
  %71 = vmatpush1.msra.mxu0 0.0
  %72 = vmatprep.subr.mxu0 0.0
  %73 = vmatpush1.msra.mxu0 0.0
  %74 = vmatprep.subr.mxu0 0.0
  %75 = vmatpush1.msra.mxu0 0.0
  %76 = vmatprep.subr.mxu0 0.0
  %77 = vmatpush1.msra.mxu0 0.0
  %78 = vmatprep.subr.mxu0 0.0
  %79 = vmatpush1.msra.mxu0 0.0
  %80 = vmatprep.subr.mxu0 0.0
  %81 = vmatpush1.msra.mxu0 0.0
  %82 = vmatprep.subr.mxu0 0.0
  %83 = vmatpush1.msra.mxu0 0.0
  %84 = vmatprep.subr.mxu0 0.0
  %85 = vmatpush1.msra.mxu0 0.0
  %86 = vmatprep.subr.mxu0 %v63
  %87 = vmatpush1.msra.mxu0 %v62
  %88 = vmatprep.subr.mxu0 %v59
  %89 = vmatpush1.msra.mxu0 %v58
  %90 = vmatprep.subr.mxu0 %v55
  %91 = vmatpush1.msra.mxu0 %v54
  %92 = vmatprep.subr.mxu0 %v51
  %93 = vmatpush1.msra.mxu0 %v50
  %94 = vmatprep.subr.mxu0 %v47
  %95 = vmatpush1.msra.mxu0 %v46
  %96 = vmatprep.subr.mxu0 %v43
  %97 = vmatpush1.msra.mxu0 %v42
  %98 = vmatprep.subr.mxu0 %v39
  %99 = vmatpush1.msra.mxu0 %v38
  %100 = vmatprep.subr.mxu0 %v35
  %101 = vmatpush1.msra.mxu0 %v34
  %102 = vmatprep.subr.mxu0 0.0
  %103 = vmatpush2.msra.mxu0 0.0
  %104 = vmatprep.subr.mxu0 0.0
  %105 = vmatpush2.msra.mxu0 0.0
  %106 = vmatprep.subr.mxu0 0.0
  %107 = vmatpush2.msra.mxu0 0.0
  %108 = vmatprep.subr.mxu0 0.0
  %109 = vmatpush2.msra.mxu0 0.0
  %110 = vmatprep.subr.mxu0 0.0
  %111 = vmatpush2.msra.mxu0 0.0
  %112 = vmatprep.subr.mxu0 0.0
  %113 = vmatpush2.msra.mxu0 0.0
  %114 = vmatprep.subr.mxu0 0.0
  %115 = vmatpush2.msra.mxu0 0.0
  %116 = vmatprep.subr.mxu0 0.0
  %117 = vmatpush2.msra.mxu0 0.0
  %118 = vmatprep.subr.mxu0 0.0
  %119 = vmatpush2.msra.mxu0 0.0
  %120 = vmatprep.subr.mxu0 0.0
  %121 = vmatpush2.msra.mxu0 0.0
  %122 = vmatprep.subr.mxu0 0.0
  %123 = vmatpush2.msra.mxu0 0.0
  %124 = vmatprep.subr.mxu0 0.0
  %125 = vmatpush2.msra.mxu0 0.0
  %126 = vmatprep.subr.mxu0 0.0
  %127 = vmatpush2.msra.mxu0 0.0
  %128 = vmatprep.subr.mxu0 0.0
  %129 = vmatpush2.msra.mxu0 0.0
  %130 = vmatprep.subr.mxu0 0.0
  %131 = vmatpush2.msra.mxu0 0.0
  %132 = vmatprep.subr.mxu0 0.0
  %133 = vmatpush2.msra.mxu0 0.0
  %134 = vmatprep.mubr.f32.mxu0 0.0
  %135 = vmatmul.mubr.f32.gmra.mxu0 %v68
  %v136 = vpop.f32.mrf.mxu0
  %v137 = vadd.f32 0.0, %v136
  %v138 = vpop.f32.mrf.mxu0
  %v139 = vadd.f32 0.0, %v138
  %140 = vdwg.mxu0
  %141 = vmatprep.subr.mxu0 0.0
  %142 = vmatpush1.msra.mxu0 0.0
  %143 = vmatprep.subr.mxu0 0.0
  %144 = vmatpush1.msra.mxu0 0.0
  %145 = vmatprep.subr.mxu0 0.0
  %146 = vmatpush1.msra.mxu0 0.0
  %147 = vmatprep.subr.mxu0 0.0
  %148 = vmatpush1.msra.mxu0 0.0
  %149 = vmatprep.subr.mxu0 0.0
  %150 = vmatpush1.msra.mxu0 0.0
  %151 = vmatprep.subr.mxu0 0.0
  %152 = vmatpush1.msra.mxu0 0.0
  %153 = vmatprep.subr.mxu0 0.0
  %154 = vmatpush1.msra.mxu0 0.0
  %155 = vmatprep.subr.mxu0 0.0
  %156 = vmatpush1.msra.mxu0 0.0
  %157 = vmatprep.subr.mxu0 %v65
  %158 = vmatpush1.msra.mxu0 %v64
  %159 = vmatprep.subr.mxu0 %v61
  %160 = vmatpush1.msra.mxu0 %v60
  %161 = vmatprep.subr.mxu0 %v57
  %162 = vmatpush1.msra.mxu0 %v56
  %163 = vmatprep.subr.mxu0 %v53
  %164 = vmatpush1.msra.mxu0 %v52
  %165 = vmatprep.subr.mxu0 %v49
  %166 = vmatpush1.msra.mxu0 %v48
  %167 = vmatprep.subr.mxu0 %v45
  %168 = vmatpush1.msra.mxu0 %v44
  %169 = vmatprep.subr.mxu0 %v41
  %170 = vmatpush1.msra.mxu0 %v40
  %171 = vmatprep.subr.mxu0 %v37
  %172 = vmatpush1.msra.mxu0 %v36
  %173 = vmatprep.subr.mxu0 0.0
  %174 = vmatpush2.msra.mxu0 0.0
  %175 = vmatprep.subr.mxu0 0.0
  %176 = vmatpush2.msra.mxu0 0.0
  %177 = vmatprep.subr.mxu0 0.0
  %178 = vmatpush2.msra.mxu0 0.0
  %179 = vmatprep.subr.mxu0 0.0
  %180 = vmatpush2.msra.mxu0 0.0
  %181 = vmatprep.subr.mxu0 0.0
  %182 = vmatpush2.msra.mxu0 0.0
  %183 = vmatprep.subr.mxu0 0.0
  %184 = vmatpush2.msra.mxu0 0.0
  %185 = vmatprep.subr.mxu0 0.0
  %186 = vmatpush2.msra.mxu0 0.0
  %187 = vmatprep.subr.mxu0 0.0
  %188 = vmatpush2.msra.mxu0 0.0
  %189 = vmatprep.subr.mxu0 0.0
  %190 = vmatpush2.msra.mxu0 0.0
  %191 = vmatprep.subr.mxu0 0.0
  %192 = vmatpush2.msra.mxu0 0.0
  %193 = vmatprep.subr.mxu0 0.0
  %194 = vmatpush2.msra.mxu0 0.0
  %195 = vmatprep.subr.mxu0 0.0
  %196 = vmatpush2.msra.mxu0 0.0
  %197 = vmatprep.subr.mxu0 0.0
  %198 = vmatpush2.msra.mxu0 0.0
  %199 = vmatprep.subr.mxu0 0.0
  %200 = vmatpush2.msra.mxu0 0.0
  %201 = vmatprep.subr.mxu0 0.0
  %202 = vmatpush2.msra.mxu0 0.0
  %203 = vmatprep.subr.mxu0 0.0
  %204 = vmatpush2.msra.mxu0 0.0
  %205 = vmatprep.mubr.f32.mxu0 0.0
  %206 = vmatmul.mubr.f32.gmra.mxu0 %v68
  %v207 = vpop.f32.mrf.mxu0
  %v208 = vadd.f32 0.0, %v207
  %v209 = vpop.f32.mrf.mxu0
  %v210 = vadd.f32 0.0, %v209
  %211 = vdwg.mxu0
  %v212 = vmax.f32 %v137, %v139
  %v213 = vmax.f32 %v208, %v210
  %v214 = vmax.f32 %v212, %v213
  %v215 = vld [vmem:[%s3] sm:$0xff]
  %v216 = vld [vmem:[%s3 + $0x8] sm:$0xff]
  %v217 = vld [vmem:[%s3 + $0x10] sm:$0xff]
  %v218 = vld [vmem:[%s3 + $0x18] sm:$0xff]
  %v219 = vld [vmem:[%s3 + $0x20] sm:$0xff]
  %v220 = vld [vmem:[%s3 + $0x28] sm:$0xff]
  %v221 = vld [vmem:[%s3 + $0x30] sm:$0xff]
  %v222 = vld [vmem:[%s3 + $0x38] sm:$0xff]
  %v223 = vld [vmem:[%s3 + $0x40] sm:$0xff]
  %v224 = vld [vmem:[%s3 + $0x48] sm:$0xff]
  %v225 = vld [vmem:[%s3 + $0x50] sm:$0xff]
  %v226 = vld [vmem:[%s3 + $0x58] sm:$0xff]
  %v227 = vld [vmem:[%s3 + $0x60] sm:$0xff]
  %v228 = vld [vmem:[%s3 + $0x68] sm:$0xff]
  %v229 = vld [vmem:[%s3 + $0x70] sm:$0xff]
  %v230 = vld [vmem:[%s3 + $0x78] sm:$0xff]
  %231 = vmatprep.subr.mxu0 0.0
  %232 = vmatpush1.msra.mxu0 %v230
  %233 = vmatprep.subr.mxu0 0.0
  %234 = vmatpush1.msra.mxu0 %v229
  %235 = vmatprep.subr.mxu0 0.0
  %236 = vmatpush1.msra.mxu0 %v228
  %237 = vmatprep.subr.mxu0 0.0
  %238 = vmatpush1.msra.mxu0 %v227
  %239 = vmatprep.subr.mxu0 0.0
  %240 = vmatpush1.msra.mxu0 %v226
  %241 = vmatprep.subr.mxu0 0.0
  %242 = vmatpush1.msra.mxu0 %v225
  %243 = vmatprep.subr.mxu0 0.0
  %244 = vmatpush1.msra.mxu0 %v224
  %245 = vmatprep.subr.mxu0 0.0
  %246 = vmatpush1.msra.mxu0 %v223
  %247 = vmatprep.subr.mxu0 0.0
  %248 = vmatpush1.msra.mxu0 %v222
  %249 = vmatprep.subr.mxu0 0.0
  %250 = vmatpush1.msra.mxu0 %v221
  %251 = vmatprep.subr.mxu0 0.0
  %252 = vmatpush1.msra.mxu0 %v220
  %253 = vmatprep.subr.mxu0 0.0
  %254 = vmatpush1.msra.mxu0 %v219
  %255 = vmatprep.subr.mxu0 0.0
  %256 = vmatpush1.msra.mxu0 %v218
  %257 = vmatprep.subr.mxu0 0.0
  %258 = vmatpush1.msra.mxu0 %v217
  %259 = vmatprep.subr.mxu0 0.0
  %260 = vmatpush1.msra.mxu0 %v216
  %261 = vmatprep.subr.mxu0 0.0
  %262 = vmatpush1.msra.mxu0 %v215
  %263 = vmatprep.subr.mxu0 0.0
  %264 = vmatpush2.msra.mxu0 0.0
  %265 = vmatprep.subr.mxu0 0.0
  %266 = vmatpush2.msra.mxu0 0.0
  %267 = vmatprep.subr.mxu0 0.0
  %268 = vmatpush2.msra.mxu0 0.0
  %269 = vmatprep.subr.mxu0 0.0
  %270 = vmatpush2.msra.mxu0 0.0
  %271 = vmatprep.subr.mxu0 0.0
  %272 = vmatpush2.msra.mxu0 0.0
  %273 = vmatprep.subr.mxu0 0.0
  %274 = vmatpush2.msra.mxu0 0.0
  %275 = vmatprep.subr.mxu0 0.0
  %276 = vmatpush2.msra.mxu0 0.0
  %277 = vmatprep.subr.mxu0 0.0
  %278 = vmatpush2.msra.mxu0 0.0
  %279 = vmatprep.subr.mxu0 0.0
  %280 = vmatpush2.msra.mxu0 0.0
  %281 = vmatprep.subr.mxu0 0.0
  %282 = vmatpush2.msra.mxu0 0.0
  %283 = vmatprep.subr.mxu0 0.0
  %284 = vmatpush2.msra.mxu0 0.0
  %285 = vmatprep.subr.mxu0 0.0
  %286 = vmatpush2.msra.mxu0 0.0
  %287 = vmatprep.subr.mxu0 0.0
  %288 = vmatpush2.msra.mxu0 0.0
  %289 = vmatprep.subr.mxu0 0.0
  %290 = vmatpush2.msra.mxu0 0.0
  %291 = vmatprep.subr.mxu0 0.0
  %292 = vmatpush2.msra.mxu0 0.0
  %293 = vmatprep.subr.mxu0 0.0
  %294 = vmatpush2.msra.mxu0 0.0
  %295 = vmatprep.mubr.f32.mxu0 0.0
  %296 = vmatmul.mubr.f32.gmra.mxu0 %v214
  %v297 = vpop.f32.mrf.mxu0
  %v298 = vadd.f32 0.0, %v297
  %v299 = vpop.f32.mrf.mxu0
  %300 = vdwg.mxu0
  %v301 = vld [vmem:[%s4] sm:$0xff]
  %v302 = vmul.f32 %v298, %v301
  %v303 = vld [vmem:[%s6] sm:$0xff]
  %v304 = vld [vmem:[%s6 + $0x8] sm:$0xff]
  %v305 = vld [vmem:[%s6 + $0x10] sm:$0xff]
  %v306 = vld [vmem:[%s6 + $0x18] sm:$0xff]
  %v307 = vld [vmem:[%s6 + $0x20] sm:$0xff]
  %v308 = vld [vmem:[%s6 + $0x28] sm:$0xff]
  %v309 = vld [vmem:[%s6 + $0x30] sm:$0xff]
  %v310 = vld [vmem:[%s6 + $0x38] sm:$0xff]
  %v311 = vld [vmem:[%s6 + $0x40] sm:$0xff]
  %v312 = vld [vmem:[%s6 + $0x48] sm:$0xff]
  %v313 = vld [vmem:[%s6 + $0x50] sm:$0xff]
  %v314 = vld [vmem:[%s6 + $0x58] sm:$0xff]
  %v315 = vld [vmem:[%s6 + $0x60] sm:$0xff]
  %v316 = vld [vmem:[%s6 + $0x68] sm:$0xff]
  %v317 = vld [vmem:[%s6 + $0x70] sm:$0xff]
  %v318 = vld [vmem:[%s6 + $0x78] sm:$0xff]
  %319 = vmatprep.subr.mxu0 0.0
  %320 = vmatpush1.msra.mxu0 %v318
  %321 = vmatprep.subr.mxu0 0.0
  %322 = vmatpush1.msra.mxu0 %v317
  %323 = vmatprep.subr.mxu0 0.0
  %324 = vmatpush1.msra.mxu0 %v316
  %325 = vmatprep.subr.mxu0 0.0
  %326 = vmatpush1.msra.mxu0 %v315
  %327 = vmatprep.subr.mxu0 0.0
  %328 = vmatpush1.msra.mxu0 %v314
  %329 = vmatprep.subr.mxu0 0.0
  %330 = vmatpush1.msra.mxu0 %v313
  %331 = vmatprep.subr.mxu0 0.0
  %332 = vmatpush1.msra.mxu0 %v312
  %333 = vmatprep.subr.mxu0 0.0
  %334 = vmatpush1.msra.mxu0 %v311
  %335 = vmatprep.subr.mxu0 0.0
  %336 = vmatpush1.msra.mxu0 %v310
  %337 = vmatprep.subr.mxu0 0.0
  %338 = vmatpush1.msra.mxu0 %v309
  %339 = vmatprep.subr.mxu0 0.0
  %340 = vmatpush1.msra.mxu0 %v308
  %341 = vmatprep.subr.mxu0 0.0
  %342 = vmatpush1.msra.mxu0 %v307
  %343 = vmatprep.subr.mxu0 0.0
  %344 = vmatpush1.msra.mxu0 %v306
  %345 = vmatprep.subr.mxu0 0.0
  %346 = vmatpush1.msra.mxu0 %v305
  %347 = vmatprep.subr.mxu0 0.0
  %348 = vmatpush1.msra.mxu0 %v304
  %349 = vmatprep.subr.mxu0 0.0
  %350 = vmatpush1.msra.mxu0 %v303
  %351 = vmatprep.subr.mxu0 0.0
  %352 = vmatpush2.msra.mxu0 0.0
  %353 = vmatprep.subr.mxu0 0.0
  %354 = vmatpush2.msra.mxu0 0.0
  %355 = vmatprep.subr.mxu0 0.0
  %356 = vmatpush2.msra.mxu0 0.0
  %357 = vmatprep.subr.mxu0 0.0
  %358 = vmatpush2.msra.mxu0 0.0
  %359 = vmatprep.subr.mxu0 0.0
  %360 = vmatpush2.msra.mxu0 0.0
  %361 = vmatprep.subr.mxu0 0.0
  %362 = vmatpush2.msra.mxu0 0.0
  %363 = vmatprep.subr.mxu0 0.0
  %364 = vmatpush2.msra.mxu0 0.0
  %365 = vmatprep.subr.mxu0 0.0
  %366 = vmatpush2.msra.mxu0 0.0
  %367 = vmatprep.subr.mxu0 0.0
  %368 = vmatpush2.msra.mxu0 0.0
  %369 = vmatprep.subr.mxu0 0.0
  %370 = vmatpush2.msra.mxu0 0.0
  %371 = vmatprep.subr.mxu0 0.0
  %372 = vmatpush2.msra.mxu0 0.0
  %373 = vmatprep.subr.mxu0 0.0
  %374 = vmatpush2.msra.mxu0 0.0
  %375 = vmatprep.subr.mxu0 0.0
  %376 = vmatpush2.msra.mxu0 0.0
  %377 = vmatprep.subr.mxu0 0.0
  %378 = vmatpush2.msra.mxu0 0.0
  %379 = vmatprep.subr.mxu0 0.0
  %380 = vmatpush2.msra.mxu0 0.0
  %381 = vmatprep.subr.mxu0 0.0
  %382 = vmatpush2.msra.mxu0 0.0
  %383 = vmatprep.mubr.f32.mxu0 0.0
  %384 = vmatmul.mubr.f32.gmra.mxu0 %v302
  %v385 = vpop.f32.mrf.mxu0
  %v386 = vadd.f32 0.0, %v385
  %v387 = vpop.f32.mrf.mxu0
  %388 = vdwg.mxu0
  %v389 = vld [vmem:[%s7] sm:$0x3]
  %v390 = vld [vmem:[%s5] sm:$0xff]
  %v391 = vlaneseq
  %v392 = vshrl.u32 %v391, 7
  %v393 = vsub.s32 0, %v392
  %v394 = vrot.slane %v389, %v393
  %vm395 = vcmask 64512
  %v397 = vsel %vm395, %v390, 0
  %399 = vmatprep.subr.mxu0 0.0
  %400 = vmatpush1.msra.mxu0 0.0
  %401 = vmatprep.subr.mxu0 0.0
  %402 = vmatpush1.msra.mxu0 0.0
  %403 = vmatprep.subr.mxu0 0.0
  %404 = vmatpush1.msra.mxu0 0.0
  %405 = vmatprep.subr.mxu0 0.0
  %406 = vmatpush1.msra.mxu0 0.0
  %407 = vmatprep.subr.mxu0 0.0
  %408 = vmatpush1.msra.mxu0 0.0
  %409 = vmatprep.subr.mxu0 0.0
  %410 = vmatpush1.msra.mxu0 0.0
  %411 = vmatprep.subr.mxu0 0.0
  %412 = vmatpush1.msra.mxu0 0.0
  %413 = vmatprep.subr.mxu0 0.0
  %414 = vmatpush1.msra.mxu0 0.0
  %415 = vmatprep.subr.mxu0 0.0
  %416 = vmatpush1.msra.mxu0 0.0
  %417 = vmatprep.subr.mxu0 0.0
  %418 = vmatpush1.msra.mxu0 0.0
  %419 = vmatprep.subr.mxu0 0.0
  %420 = vmatpush1.msra.mxu0 0.0
  %421 = vmatprep.subr.mxu0 0.0
  %422 = vmatpush1.msra.mxu0 0.0
  %423 = vmatprep.subr.mxu0 0.0
  %424 = vmatpush1.msra.mxu0 0.0
  %425 = vmatprep.subr.mxu0 0.0
  %426 = vmatpush1.msra.mxu0 0.0
  %427 = vmatprep.subr.mxu0 0.0
  %428 = vmatpush1.msra.mxu0 0.0
  %429 = vmatprep.subr.mxu0 0.0
  %430 = vmatpush1.msra.mxu0 %v386
  %431 = vmatprep.subr.mxu0 0.0
  %432 = vmatpush2.msra.mxu0 0.0
  %433 = vmatprep.subr.mxu0 0.0
  %434 = vmatpush2.msra.mxu0 0.0
  %435 = vmatprep.subr.mxu0 0.0
  %436 = vmatpush2.msra.mxu0 0.0
  %437 = vmatprep.subr.mxu0 0.0
  %438 = vmatpush2.msra.mxu0 0.0
  %439 = vmatprep.subr.mxu0 0.0
  %440 = vmatpush2.msra.mxu0 0.0
  %441 = vmatprep.subr.mxu0 0.0
  %442 = vmatpush2.msra.mxu0 0.0
  %443 = vmatprep.subr.mxu0 0.0
  %444 = vmatpush2.msra.mxu0 0.0
  %445 = vmatprep.subr.mxu0 0.0
  %446 = vmatpush2.msra.mxu0 0.0
  %447 = vmatprep.subr.mxu0 0.0
  %448 = vmatpush2.msra.mxu0 0.0
  %449 = vmatprep.subr.mxu0 0.0
  %450 = vmatpush2.msra.mxu0 0.0
  %451 = vmatprep.subr.mxu0 0.0
  %452 = vmatpush2.msra.mxu0 0.0
  %453 = vmatprep.subr.mxu0 0.0
  %454 = vmatpush2.msra.mxu0 0.0
  %455 = vmatprep.subr.mxu0 0.0
  %456 = vmatpush2.msra.mxu0 0.0
  %457 = vmatprep.subr.mxu0 0.0
  %458 = vmatpush2.msra.mxu0 0.0
  %459 = vmatprep.subr.mxu0 0.0
  %460 = vmatpush2.msra.mxu0 0.0
  %461 = vmatprep.subr.mxu0 0.0
  %462 = vmatpush2.msra.mxu0 0.0
  %463 = vmatprep.mubr.f32.mxu0 0.0
  %464 = vmatmul.mubr.f32.gmra.mxu0 %v397
  %v465 = vpop.f32.mrf.mxu0
  %v466 = vadd.f32 %v394, %v465
  %v467 = vpop.f32.mrf.mxu0
  %468 = vdwg.mxu0
  %s469 = sld [smem:[#allocation2]]
  %vm470 = vcmp.ge.f32.partialorder %v466, 0.0
  %v471 = vstv %s469
  %v472 = vmul.f32 %v471, %v466
  %v473 = vsel %vm470, %v466, %v472
  %v474 = vld [vmem:[%s8] sm:$0xff]
  %v475 = vld [vmem:[%s8 + $0x8] sm:$0xff]
  %v476 = vld [vmem:[%s8 + $0x10] sm:$0xff]
  %v477 = vld [vmem:[%s8 + $0x18] sm:$0xff]
  %v478 = vlaneseq
  %v479 = vshrl.u32 %v478, 7
  %v480 = vsub.s32 1, %v479
  %v481 = vrot.slane %v389, %v480
  %vm482 = vcmask 261120
  %v484 = vsel %vm482, %v473, 0
  %486 = vmatprep.subr.mxu0 0.0
  %487 = vmatpush1.msra.mxu0 0.0
  %488 = vmatprep.subr.mxu0 0.0
  %489 = vmatpush1.msra.mxu0 0.0
  %490 = vmatprep.subr.mxu0 0.0
  %491 = vmatpush1.msra.mxu0 0.0
  %492 = vmatprep.subr.mxu0 0.0
  %493 = vmatpush1.msra.mxu0 0.0
  %494 = vmatprep.subr.mxu0 0.0
  %495 = vmatpush1.msra.mxu0 0.0
  %496 = vmatprep.subr.mxu0 0.0
  %497 = vmatpush1.msra.mxu0 0.0
  %498 = vmatprep.subr.mxu0 0.0
  %499 = vmatpush1.msra.mxu0 0.0
  %500 = vmatprep.subr.mxu0 0.0
  %501 = vmatpush1.msra.mxu0 0.0
  %502 = vmatprep.subr.mxu0 0.0
  %503 = vmatpush1.msra.mxu0 0.0
  %504 = vmatprep.subr.mxu0 0.0
  %505 = vmatpush1.msra.mxu0 0.0
  %506 = vmatprep.subr.mxu0 0.0
  %507 = vmatpush1.msra.mxu0 0.0
  %508 = vmatprep.subr.mxu0 0.0
  %509 = vmatpush1.msra.mxu0 0.0
  %510 = vmatprep.subr.mxu0 0.0
  %511 = vmatpush1.msra.mxu0 %v477
  %512 = vmatprep.subr.mxu0 0.0
  %513 = vmatpush1.msra.mxu0 %v476
  %514 = vmatprep.subr.mxu0 0.0
  %515 = vmatpush1.msra.mxu0 %v475
  %516 = vmatprep.subr.mxu0 0.0
  %517 = vmatpush1.msra.mxu0 %v474
  %518 = vmatprep.subr.mxu0 0.0
  %519 = vmatpush2.msra.mxu0 0.0
  %520 = vmatprep.subr.mxu0 0.0
  %521 = vmatpush2.msra.mxu0 0.0
  %522 = vmatprep.subr.mxu0 0.0
  %523 = vmatpush2.msra.mxu0 0.0
  %524 = vmatprep.subr.mxu0 0.0
  %525 = vmatpush2.msra.mxu0 0.0
  %526 = vmatprep.subr.mxu0 0.0
  %527 = vmatpush2.msra.mxu0 0.0
  %528 = vmatprep.subr.mxu0 0.0
  %529 = vmatpush2.msra.mxu0 0.0
  %530 = vmatprep.subr.mxu0 0.0
  %531 = vmatpush2.msra.mxu0 0.0
  %532 = vmatprep.subr.mxu0 0.0
  %533 = vmatpush2.msra.mxu0 0.0
  %534 = vmatprep.subr.mxu0 0.0
  %535 = vmatpush2.msra.mxu0 0.0
  %536 = vmatprep.subr.mxu0 0.0
  %537 = vmatpush2.msra.mxu0 0.0
  %538 = vmatprep.subr.mxu0 0.0
  %539 = vmatpush2.msra.mxu0 0.0
  %540 = vmatprep.subr.mxu0 0.0
  %541 = vmatpush2.msra.mxu0 0.0
  %542 = vmatprep.subr.mxu0 0.0
  %543 = vmatpush2.msra.mxu0 0.0
  %544 = vmatprep.subr.mxu0 0.0
  %545 = vmatpush2.msra.mxu0 0.0
  %546 = vmatprep.subr.mxu0 0.0
  %547 = vmatpush2.msra.mxu0 0.0
  %548 = vmatprep.subr.mxu0 0.0
  %549 = vmatpush2.msra.mxu0 0.0
  %550 = vmatprep.mubr.f32.mxu0 0.0
  %551 = vmatmul.mubr.f32.gmra.mxu0 %v484
  %v552 = vpop.f32.mrf.mxu0
  %v553 = vadd.f32 %v481, %v552
  %v554 = vpop.f32.mrf.mxu0
  %555 = vdwg.mxu0
  %556 = vst [vmem:[%s9] sm:$0xff] %v553
  // Predicated region
  $region38: #{forward.1} parent=0 // pred_check
    _
  $region39: #{forward.1} parent=0 // pred_check_branch
    %558 = sbr.rel (0) target = $region41
  $region40: #{forward.1} parent=0 // pred_region
    _
  $region41: #{forward.1} parent=0 // pred_fallthru
    _
  // Predicated region
  $region42: #{forward.1} parent=0 // pred_check
    _
  $region43: #{forward.1} parent=0 // pred_check_branch
    %560 = sbr.rel (0) target = $region45
  $region44: #{forward.1} parent=0 // pred_region
    _
  $region45: #{forward.1} parent=0 // pred_fallthru
    _

</llo_original>
